<compile_context>
chip_gen: v7x
topology: tpu7x:2x2x1
jax: 0.10.0
libtpu: 0.0.40
codegen_flags: <defaults>
</compile_context>

<pallas_src>
import math
import jax
import jax.numpy as jnp
from jax.experimental import pallas as pl
from jax.experimental.pallas import tpu as pltpu


# ----------------------------- in-kernel helpers -----------------------------

_GELU_C = math.sqrt(2.0 / math.pi)


def _gelu_tanh(x):
    # GELU(approximate='tanh'), computed in f32 (tanh goes to the EUP slot).
    return 0.5 * x * (1.0 + jnp.tanh(_GELU_C * (x + 0.044715 * x * x * x)))


# ----------------------------- kernel bodies -----------------------------

def _mlp_resident_kernel(x_ref, wfc_ref, bfc_ref, wpr_ref, bpr_ref, o_ref):
    """Weights fully VMEM-resident; 1-D grid over row tiles."""
    x = x_ref[...].astype(wfc_ref.dtype)
    h = jnp.dot(x, wfc_ref[...], preferred_element_type=jnp.float32)
    h = _gelu_tanh(h + bfc_ref[...])                      # f32 bias + GELU
    y = jnp.dot(h.astype(wpr_ref.dtype), wpr_ref[...],
                preferred_element_type=jnp.float32)
    o_ref[...] = (y + bpr_ref[...]).astype(o_ref.dtype)


def _mlp_streamed_kernel(x_ref, wfc_ref, bfc_ref, wpr_ref, bpr_ref, o_ref,
                         xb_ref, acc_ref):
    """Large-E fallback: 2-D grid (rows x hidden chunks) with f32 accumulator."""
    j = pl.program_id(1)

    @pl.when(j == 0)
    def _init():
        # Hoist the x -> bf16 cast: done once per row tile, reused every j step.
        xb_ref[...] = x_ref[...].astype(xb_ref.dtype)
        acc_ref[...] = jnp.zeros_like(acc_ref)

    h = jnp.dot(xb_ref[...], wfc_ref[...], preferred_element_type=jnp.float32)
    h = _gelu_tanh(h + bfc_ref[...])
    acc_ref[...] += jnp.dot(h.astype(wpr_ref.dtype), wpr_ref[...],
                            preferred_element_type=jnp.float32)

    @pl.when(j == pl.num_programs(1) - 1)
    def _finalize():
        o_ref[...] = (acc_ref[...] + bpr_ref[...]).astype(o_ref.dtype)


# ----------------------------- wrapper helpers -----------------------------

def _round_up(n, m):
    return ((n + m - 1) // m) * m


def _chip_config():
    """Per-generation VMEM budget and preferred tile sizes."""
    vmem_cap = 64 * 1024 * 1024                  # conservative default (v7x/TC)
    try:
        vmem_cap = int(pltpu.get_tpu_info().vmem_capacity_bytes)
    except Exception:
        pass
    if vmem_cap >= 96 * 1024 * 1024:             # v5e / v6e: 128 MiB VMEM
        return dict(vmem_limit=100 * 1024 * 1024, tm=1024, th=1024)
    # v7x: 64 MiB per TensorCore -> smaller tiles, tighter limit
    return dict(vmem_limit=52 * 1024 * 1024, tm=512, th=512)


def _pick_hidden_tile(hidden, pref):
    """Largest multiple of 256 (else 128) <= pref that divides `hidden`."""
    if hidden <= pref:
        return hidden
    for step in (256, 128):
        t = (pref // step) * step
        while t >= step:
            if hidden % t == 0:
                return t
            t -= step
    return hidden


# ----------------------------- public forward -----------------------------

def mlp_forward(x, w_fc, b_fc, w_proj, b_proj, *, force_streamed=False):
    """x: (..., E); w_fc: (E, 4E); w_proj: (4E, E) (bf16 preferred); biases f32."""
    orig_shape = x.shape
    E = orig_shape[-1]
    H = w_fc.shape[1]

    x2 = x.reshape(-1, E)
    N = x2.shape[0]

    cfg = _chip_config()
    budget = int(0.9 * cfg["vmem_limit"])
    x_b = x2.dtype.itemsize
    o_b = x_b                                    # output keeps activation dtype
    w_b = w_fc.dtype.itemsize

    # ---- row tile: per-chip preference, capped by N, keep >=2 tiles (v7x) ----
    tm = min(cfg["tm"], _round_up(N, 8))
    if N > 8 and -(-N // tm) < 2:
        tm = _round_up(-(-N // 2), 8)

    # ---- choose resident vs streamed path ----
    w_bytes = 2 * E * H * w_b + (H + E) * 4      # both weight slabs + biases

    def resident_need(t, w_buffers):
        return (w_buffers * w_bytes              # weights (1x or 2x buffered)
                + 2 * t * E * (x_b + o_b)        # double-buffered in/out tiles
                + t * H * (4 + w_b))             # (t, H) f32 + bf16 intermediates

    use_resident = False
    single_buffer_w = False
    if not force_streamed:
        if resident_need(tm, 2) <= budget:
            use_resident = True
        elif hasattr(pl, "Buffered") and resident_need(tm, 1) <= budget:
            use_resident, single_buffer_w = True, True

    th = None
    if not use_resident:
        th = _pick_hidden_tile(H, cfg["th"])

        def streamed_need(t, h_t):
            return (2 * t * E * (x_b + o_b)      # in/out tiles, double-buffered
                    + 4 * E * h_t * w_b          # weight slabs, double-buffered
                    + t * E * (4 + 2)            # f32 accumulator + bf16 x scratch
                    + t * h_t * (4 + w_b)        # (t, th) intermediates
                    + 2 * (h_t + E) * 4)         # biases

        while streamed_need(tm, th) > budget and tm > 256:
            tm = max(256, _round_up(tm // 2, 8))
        while streamed_need(tm, th) > budget and th > 256:
            th = _pick_hidden_tile(H, th // 2)

    n_pad = _round_up(N, tm)
    if n_pad != N:
        x2 = jnp.pad(x2, ((0, n_pad - N), (0, 0)))

    b_fc2 = b_fc.reshape(1, H).astype(jnp.float32)
    b_pr2 = b_proj.reshape(1, E).astype(jnp.float32)

    if use_resident:
        def wspec(shape):
            # Weight blocks never change -> constant index_map; request a single
            # buffer (no double-buffering) when it is needed to fit VMEM.
            if single_buffer_w:
                try:
                    return pl.BlockSpec(shape, lambda i: (0, 0),
                                        pipeline_mode=pl.Buffered(1))
                except TypeError:
                    pass
            return pl.BlockSpec(shape, lambda i: (0, 0))

        out = pl.pallas_call(
            _mlp_resident_kernel,
            out_shape=jax.ShapeDtypeStruct((n_pad, E), x.dtype),
            grid=(n_pad // tm,),
            in_specs=[
                pl.BlockSpec((tm, E), lambda i: (i, 0)),   # x row tile
                wspec((E, H)),                             # fc weight (VMEM-resident)
                wspec((1, H)),                             # fc bias
                wspec((H, E)),                             # proj weight (VMEM-resident)
                wspec((1, E)),                             # proj bias
            ],
            out_specs=pl.BlockSpec((tm, E), lambda i: (i, 0)),
            compiler_params=pltpu.CompilerParams(
                dimension_semantics=("parallel",),
                vmem_limit_bytes=cfg["vmem_limit"],
            ),
        )(x2, w_fc, b_fc2, w_proj, b_pr2)
    else:
        grid = (n_pad // tm, H // th)
        out = pl.pallas_call(
            _mlp_streamed_kernel,
            out_shape=jax.ShapeDtypeStruct((n_pad, E), x.dtype),
            grid=grid,
            in_specs=[
                pl.BlockSpec((tm, E), lambda i, j: (i, 0)),  # x row tile
                pl.BlockSpec((E, th), lambda i, j: (0, j)),  # fc weight slab
                pl.BlockSpec((1, th), lambda i, j: (0, j)),  # fc bias chunk
                pl.BlockSpec((th, E), lambda i, j: (j, 0)),  # proj weight slab
                pl.BlockSpec((1, E), lambda i, j: (0, 0)),   # proj bias
            ],
            out_specs=pl.BlockSpec((tm, E), lambda i, j: (i, 0)),
            scratch_shapes=[pltpu.VMEM((tm, E), jnp.bfloat16),  # hoisted bf16 x
                            pltpu.VMEM((tm, E), jnp.float32)],  # f32 accumulator
            compiler_params=pltpu.CompilerParams(
                dimension_semantics=("parallel", "arbitrary"),
                vmem_limit_bytes=cfg["vmem_limit"],
            ),
        )(x2, w_fc, b_fc2, w_proj, b_pr2)

    if n_pad != N:
        out = out[:N]
    return out.reshape(orig_shape)


# ----------------------------- reference (pure JAX, same precision) -----------

def mlp_reference(x, w_fc, b_fc, w_proj, b_proj):
    x2 = x.astype(w_fc.dtype)
    h = jnp.dot(x2, w_fc, preferred_element_type=jnp.float32) + b_fc
    h = _gelu_tanh(h)
    y = jnp.dot(h.astype(w_proj.dtype), w_proj,
                preferred_element_type=jnp.float32) + b_proj
    return y.astype(x.dtype)


# ----------------------------- parameter init -----------------------------

def init_mlp_params(key, n_embed, n_layer=12):
    std = 0.02
    proj_std = 0.02 * (2 * n_layer) ** (-0.5)   # NANOGPT_SCALE_INIT
    k0, k1, k2, k3 = jax.random.split(key, 4)
    w_fc = (std * jax.random.normal(k0, (n_embed, 4 * n_embed), jnp.float32)
            ).astype(jnp.bfloat16)
    b_fc = 0.01 * jax.random.normal(k1, (4 * n_embed,), jnp.float32)
    w_proj = (proj_std * jax.random.normal(k2, (4 * n_embed, n_embed), jnp.float32)
              ).astype(jnp.bfloat16)
    b_proj = 0.01 * jax.random.normal(k3, (n_embed,), jnp.float32)
    return w_fc, b_fc, w_proj, b_proj


# ----------------------------- main -----------------------------

if __name__ == "__main__":
    # Small config consistent with GPTConfig semantics (hidden = 4 * n_embed).
    batch, seq, n_embed = 2, 8, 32

    key = jax.random.PRNGKey(0)
    pkey, xkey = jax.random.split(key)
    w_fc, b_fc, w_proj, b_proj = init_mlp_params(pkey, n_embed)
    x = jax.random.normal(xkey, (batch, seq, n_embed), jnp.float32)

    y_ref = mlp_reference(x, w_fc, b_fc, w_proj, b_proj)

    # Path 1: VMEM-resident weights (default at GPT-2-scale and below).
    y = jax.block_until_ready(mlp_forward(x, w_fc, b_fc, w_proj, b_proj))
    assert y.shape == (batch, seq, n_embed)
    assert jnp.all(jnp.isfinite(y))
    assert jnp.allclose(y, y_ref, rtol=1e-2, atol=1e-2), \
        float(jnp.max(jnp.abs(y - y_ref)))

    # Path 2: streamed / hidden-tiled reduction fallback (large-E path, forced).
    y2 = jax.block_until_ready(
        mlp_forward(x, w_fc, b_fc, w_proj, b_proj, force_streamed=True))
    assert jnp.allclose(y2, y_ref, rtol=1e-2, atol=1e-2), \
        float(jnp.max(jnp.abs(y2 - y_ref)))

    print("KERNEL_OK")
</pallas_src>

<mosaic_0001>
module attributes {stable_mosaic.version = 11 : i64} {
  func.func @_mlp_resident_kernel(%arg0: i32, %arg1: memref<8x32xf32, #tpu.memory_space<vmem>>, %arg2: memref<32x128xbf16, #tpu.memory_space<vmem>>, %arg3: memref<1x128xf32, #tpu.memory_space<vmem>>, %arg4: memref<128x32xbf16, #tpu.memory_space<vmem>>, %arg5: memref<1x32xf32, #tpu.memory_space<vmem>>, %arg6: memref<8x32xf32, #tpu.memory_space<vmem>>) attributes {dimension_semantics = [#tpu.dimension_semantics<parallel>], iteration_bounds = array<i64: 2>, scalar_prefetch = 0 : i64, scratch_operands = 0 : i64, tpu.core_type = #tpu.core_type<tc>, window_params = [{transform_indices = @transform_0, window_bounds = array<i64: 8, 32>}, {pipeline_mode = #tpu.pipeline_mode<synchronous>, transform_indices = @transform_1, window_bounds = array<i64: 32, 128>}, {pipeline_mode = #tpu.pipeline_mode<synchronous>, transform_indices = @transform_2, window_bounds = array<i64: 1, 128>}, {pipeline_mode = #tpu.pipeline_mode<synchronous>, transform_indices = @transform_3, window_bounds = array<i64: 128, 32>}, {pipeline_mode = #tpu.pipeline_mode<synchronous>, transform_indices = @transform_4, window_bounds = array<i64: 1, 32>}, {transform_indices = @transform_5, window_bounds = array<i64: 8, 32>}]} {
    %c0 = arith.constant 0 : index
    %c0_0 = arith.constant 0 : index
    %0 = vector.load %arg1[%c0, %c0_0] : memref<8x32xf32, #tpu.memory_space<vmem>>, vector<8x32xf32>
    %1 = arith.truncf %0 : vector<8x32xf32> to vector<8x32xbf16>
    %c0_1 = arith.constant 0 : index
    %c0_2 = arith.constant 0 : index
    %2 = vector.load %arg2[%c0_1, %c0_2] : memref<32x128xbf16, #tpu.memory_space<vmem>>, vector<32x128xbf16>
    %cst = arith.constant dense<0.000000e+00> : vector<8x128xf32>
    %3 = tpu.matmul %1, %2, %cst {dimension_numbers = #tpu.dot_dimension_numbers<[1], [0], [0], [1], [0, 0, 1, 1], [], []>} : vector<8x32xbf16>, vector<32x128xbf16>, vector<8x128xf32> -> vector<8x128xf32>
    %c0_3 = arith.constant 0 : index
    %c0_4 = arith.constant 0 : index
    %4 = vector.load %arg3[%c0_3, %c0_4] : memref<1x128xf32, #tpu.memory_space<vmem>>, vector<1x128xf32>
    %5 = vector.broadcast %4 : vector<1x128xf32> to vector<8x128xf32>
    %6 = arith.addf %3, %5 : vector<8x128xf32>
    %cst_5 = arith.constant 5.000000e-01 : f32
    %7 = vector.broadcast %cst_5 : f32 to vector<8x128xf32>
    %8 = arith.mulf %7, %6 : vector<8x128xf32>
    %cst_6 = arith.constant 4.471500e-02 : f32
    %9 = vector.broadcast %cst_6 : f32 to vector<8x128xf32>
    %10 = arith.mulf %9, %6 : vector<8x128xf32>
    %11 = arith.mulf %10, %6 : vector<8x128xf32>
    %12 = arith.mulf %11, %6 : vector<8x128xf32>
    %13 = arith.addf %6, %12 : vector<8x128xf32>
    %cst_7 = arith.constant 0.797884583 : f32
    %14 = vector.broadcast %cst_7 : f32 to vector<8x128xf32>
    %15 = arith.mulf %14, %13 : vector<8x128xf32>
    %16 = math.tanh %15 : vector<8x128xf32>
    %cst_8 = arith.constant 1.000000e+00 : f32
    %17 = vector.broadcast %cst_8 : f32 to vector<8x128xf32>
    %18 = arith.addf %17, %16 : vector<8x128xf32>
    %19 = arith.mulf %8, %18 : vector<8x128xf32>
    %20 = arith.truncf %19 : vector<8x128xf32> to vector<8x128xbf16>
    %c0_9 = arith.constant 0 : index
    %c0_10 = arith.constant 0 : index
    %21 = vector.load %arg4[%c0_9, %c0_10] : memref<128x32xbf16, #tpu.memory_space<vmem>>, vector<128x32xbf16>
    %cst_11 = arith.constant dense<0.000000e+00> : vector<8x32xf32>
    %22 = tpu.matmul %20, %21, %cst_11 {dimension_numbers = #tpu.dot_dimension_numbers<[1], [0], [0], [1], [0, 0, 1, 1], [], []>} : vector<8x128xbf16>, vector<128x32xbf16>, vector<8x32xf32> -> vector<8x32xf32>
    %c0_12 = arith.constant 0 : index
    %c0_13 = arith.constant 0 : index
    %23 = vector.load %arg5[%c0_12, %c0_13] : memref<1x32xf32, #tpu.memory_space<vmem>>, vector<1x32xf32>
    %24 = vector.broadcast %23 : vector<1x32xf32> to vector<8x32xf32>
    %25 = arith.addf %22, %24 : vector<8x32xf32>
    %c0_14 = arith.constant 0 : index
    %c0_15 = arith.constant 0 : index
    %26 = vector.load %arg6[%c0_14, %c0_15] : memref<8x32xf32, #tpu.memory_space<vmem>>, vector<8x32xf32>
    tpu.vector_store %arg6[%c0_14, %c0_15], %25 {strides = array<i32>} : memref<8x32xf32, #tpu.memory_space<vmem>>, vector<8x32xf32>,
    return
  }
  func.func @transform_0(%arg0: i32) -> (i32, i32) {
    %c0_i32 = arith.constant 0 : i32
    %c0_i32_0 = arith.constant 0 : i32
    return %arg0, %c0_i32 : i32, i32
  }
  func.func @transform_1(%arg0: i32) -> (i32, i32) {
    %c0_i32 = arith.constant 0 : i32
    %c0_i32_0 = arith.constant 0 : i32
    %c0_i32_1 = arith.constant 0 : i32
    return %c0_i32, %c0_i32_0 : i32, i32
  }
  func.func @transform_2(%arg0: i32) -> (i32, i32) {
    %c0_i32 = arith.constant 0 : i32
    %c0_i32_0 = arith.constant 0 : i32
    %c0_i32_1 = arith.constant 0 : i32
    return %c0_i32, %c0_i32_0 : i32, i32
  }
  func.func @transform_3(%arg0: i32) -> (i32, i32) {
    %c0_i32 = arith.constant 0 : i32
    %c0_i32_0 = arith.constant 0 : i32
    %c0_i32_1 = arith.constant 0 : i32
    return %c0_i32, %c0_i32_0 : i32, i32
  }
  func.func @transform_4(%arg0: i32) -> (i32, i32) {
    %c0_i32 = arith.constant 0 : i32
    %c0_i32_0 = arith.constant 0 : i32
    %c0_i32_1 = arith.constant 0 : i32
    return %c0_i32, %c0_i32_0 : i32, i32
  }
  func.func @transform_5(%arg0: i32) -> (i32, i32) {
    %c0_i32 = arith.constant 0 : i32
    %c0_i32_0 = arith.constant 0 : i32
    return %arg0, %c0_i32 : i32, i32
  }
}

</mosaic_0001>

<llo_original>
// kernel: tpu_custom_call.1
$region0: #{tpu_custom_call.1}
  #allocation0 [shape = 'u32[]', space=smem, size = 0x4, offset = 0x4, fixed_abs, tag = 'smem constant byte address 0x4 - core index']
  #allocation1 [shape = 'u32[144,128]{1,0:T(1,128)}', space=vmem, size = 0x12000, scoped, tag = 'internal scratch']
  %s0 = inlined_call_operand.vmem [shape: f32[16,32], index: 0, kind: input, shape index: {}]
  %s1 = inlined_call_operand.vmem [shape: bf16[32,128], index: 1, kind: input, shape index: {}]
  %s2 = inlined_call_operand.vmem [shape: f32[1,128], index: 2, kind: input, shape index: {}]
  %s3 = inlined_call_operand.vmem [shape: bf16[128,32], index: 3, kind: input, shape index: {}]
  %s4 = inlined_call_operand.vmem [shape: f32[1,32], index: 4, kind: input, shape index: {}]
  %s5 = inlined_call_operand.hbm [shape: f32[16,32], index: 5, kind: output, shape index: {}]
  %s6 = sld [smem:[#allocation0]]
  $region53: #{tpu_custom_call.1} parent=0
    _
  %s8 = ssub.s32 1, %s6
  %s9 = scalar_select 0, %s8, %s6
  $region1: #{tpu_custom_call.1} parent=0
    #allocation2 [shape = 'u8[8192]{0}', space=vmem, size = 0x2000, scoped, tag = 'output window, operand 0']
    #allocation3 [shape = 's32[2]{0}', space=sflag, size = 0x8, scoped, tag = 'scoped memory for tpu_custom_call.1']
    %10 = vsyncpa [#allocation3], 0
    %s11 = scalar_lea.sflag [#allocation3], 1
    %12 = vsyncpa %s11, 0
    loop: start=0, step=1, limit=4
    $region2: #{tpu_custom_call.1} parent=1 // loop_pre_header
      _
    $region3: #{tpu_custom_call.1} parent=1 // loop_header
      %s14 = sphi 0, %s18
      %p15 = scmp.ge.s32.totalorder %s14, 4
      %s24 = sphi 0, %s26
      %s27 = sphi 0, %s24
      %s28 = sphi 0, %s27
      %s44 = sphi 0, %s28
      %s48 = sphi 0, %s48
      %s50 = sphi 0, %s48
      %s51 = sphi 0, %s50
      %s65 = sphi 0, %s51
      %s69 = sphi 0, %s69
      %s71 = sphi 0, %s69
      %s72 = sphi 0, %s71
      %s86 = sphi 0, %s72
      %s90 = sphi 0, %s90
      %s92 = sphi 0, %s90
      %s93 = sphi 0, %s92
      %s107 = sphi 0, %s93
      %s111 = sphi 0, %s111
      %s113 = sphi 0, %s111
      %s114 = sphi 0, %s113
      %s128 = sphi 0, %s114
      %s134 = sphi 0, %s136
      %s137 = sphi 0, %s134
      %s138 = sphi 0, %s137
      %s154 = sphi 0, %s138
    $region4: #{tpu_custom_call.1} parent=1 // loop_header_branch
      %17 = sbr.rel (%p15) target = $region8
    $region5: #{tpu_custom_call.1} parent=1 // loop_body
      %s19 = ssub.s32 %s14, 1
      %s20 = ssub.s32 %s14, 2
      %s21 = sadd.s32 %s14, 1
      %s22 = ssub.s32 %s14, %s21
      %p23 = scmp.eq.s32.totalorder %s22, 0
      %s25 = sadd.s32 %s24, 1
      %s26 = scalar_select %p23, %s24, %s25
      %p29 = pneg %p23
      %p30 = scmp.eq.s32.totalorder %s14, 1
      %p31 = por %p29, %p30
      %p32 = scmp.ne.s32.totalorder %s24, %s27
      %p33 = scmp.eq.s32.totalorder %s14, 0
      %p34 = por %p32, %p33
      %p35 = scmp.ne.s32.totalorder %s24, %s27
      %p36 = scmp.eq.s32.totalorder %s19, 1
      %p37 = por %p35, %p36
      %p38 = scmp.ne.s32.totalorder %s27, %s28
      %p39 = scmp.eq.s32.totalorder %s19, 0
      %p40 = por %p38, %p39
      %p41 = scmp.ne.s32.totalorder %s27, %s28
      %p42 = scmp.eq.s32.totalorder %s20, 1
      %p43 = por %p41, %p42
      %p45 = scmp.ne.s32.totalorder %s28, %s44
      %p46 = scmp.eq.s32.totalorder %s20, 0
      %p47 = por %p45, %p46
      %s49 = sadd.s32 %s48, 1
      %p52 = scmp.eq.s32.totalorder %s14, 1
      %p53 = scmp.ne.s32.totalorder %s48, %s50
      %p54 = scmp.eq.s32.totalorder %s14, 0
      %p55 = por %p53, %p54
      %p56 = scmp.ne.s32.totalorder %s48, %s50
      %p57 = scmp.eq.s32.totalorder %s19, 1
      %p58 = por %p56, %p57
      %p59 = scmp.ne.s32.totalorder %s50, %s51
      %p60 = scmp.eq.s32.totalorder %s19, 0
      %p61 = por %p59, %p60
      %p62 = scmp.ne.s32.totalorder %s50, %s51
      %p63 = scmp.eq.s32.totalorder %s20, 1
      %p64 = por %p62, %p63
      %p66 = scmp.ne.s32.totalorder %s51, %s65
      %p67 = scmp.eq.s32.totalorder %s20, 0
      %p68 = por %p66, %p67
      %s70 = sadd.s32 %s69, 1
      %p73 = scmp.eq.s32.totalorder %s14, 1
      %p74 = scmp.ne.s32.totalorder %s69, %s71
      %p75 = scmp.eq.s32.totalorder %s14, 0
      %p76 = por %p74, %p75
      %p77 = scmp.ne.s32.totalorder %s69, %s71
      %p78 = scmp.eq.s32.totalorder %s19, 1
      %p79 = por %p77, %p78
      %p80 = scmp.ne.s32.totalorder %s71, %s72
      %p81 = scmp.eq.s32.totalorder %s19, 0
      %p82 = por %p80, %p81
      %p83 = scmp.ne.s32.totalorder %s71, %s72
      %p84 = scmp.eq.s32.totalorder %s20, 1
      %p85 = por %p83, %p84
      %p87 = scmp.ne.s32.totalorder %s72, %s86
      %p88 = scmp.eq.s32.totalorder %s20, 0
      %p89 = por %p87, %p88
      %s91 = sadd.s32 %s90, 1
      %p94 = scmp.eq.s32.totalorder %s14, 1
      %p95 = scmp.ne.s32.totalorder %s90, %s92
      %p96 = scmp.eq.s32.totalorder %s14, 0
      %p97 = por %p95, %p96
      %p98 = scmp.ne.s32.totalorder %s90, %s92
      %p99 = scmp.eq.s32.totalorder %s19, 1
      %p100 = por %p98, %p99
      %p101 = scmp.ne.s32.totalorder %s92, %s93
      %p102 = scmp.eq.s32.totalorder %s19, 0
      %p103 = por %p101, %p102
      %p104 = scmp.ne.s32.totalorder %s92, %s93
      %p105 = scmp.eq.s32.totalorder %s20, 1
      %p106 = por %p104, %p105
      %p108 = scmp.ne.s32.totalorder %s93, %s107
      %p109 = scmp.eq.s32.totalorder %s20, 0
      %p110 = por %p108, %p109
      %s112 = sadd.s32 %s111, 1
      %p115 = scmp.eq.s32.totalorder %s14, 1
      %p116 = scmp.ne.s32.totalorder %s111, %s113
      %p117 = scmp.eq.s32.totalorder %s14, 0
      %p118 = por %p116, %p117
      %p119 = scmp.ne.s32.totalorder %s111, %s113
      %p120 = scmp.eq.s32.totalorder %s19, 1
      %p121 = por %p119, %p120
      %p122 = scmp.ne.s32.totalorder %s113, %s114
      %p123 = scmp.eq.s32.totalorder %s19, 0
      %p124 = por %p122, %p123
      %p125 = scmp.ne.s32.totalorder %s113, %s114
      %p126 = scmp.eq.s32.totalorder %s20, 1
      %p127 = por %p125, %p126
      %p129 = scmp.ne.s32.totalorder %s114, %s128
      %p130 = scmp.eq.s32.totalorder %s20, 0
      %p131 = por %p129, %p130
      %s132 = ssub.s32 %s14, %s21
      %p133 = scmp.eq.s32.totalorder %s132, 0
      %s135 = sadd.s32 %s134, 1
      %s136 = scalar_select %p133, %s134, %s135
      %p139 = pneg %p133
      %p140 = scmp.eq.s32.totalorder %s14, 1
      %p141 = por %p139, %p140
      %p142 = scmp.ne.s32.totalorder %s134, %s137
      %p143 = scmp.eq.s32.totalorder %s14, 0
      %p144 = por %p142, %p143
      %p145 = scmp.ne.s32.totalorder %s134, %s137
      %p146 = scmp.eq.s32.totalorder %s19, 1
      %p147 = por %p145, %p146
      %p148 = scmp.ne.s32.totalorder %s137, %s138
      %p149 = scmp.eq.s32.totalorder %s19, 0
      %p150 = por %p148, %p149
      %p151 = scmp.ne.s32.totalorder %s137, %s138
      %p152 = scmp.eq.s32.totalorder %s20, 1
      %p153 = por %p151, %p152
      %p155 = scmp.ne.s32.totalorder %s138, %s154
      %p156 = scmp.eq.s32.totalorder %s20, 0
      %p157 = por %p155, %p156
      %p158 = scmp.le.s32.totalorder 1, %s14
      %p159 = scmp.lt.s32.totalorder %s14, 3
      %p160 = pnand %p158, %p159
      %p161 = pneg %p160
      // Predicated region
      $region9: #{tpu_custom_call.1} parent=5 // pred_check
        _
      $region10: #{tpu_custom_call.1} parent=5 // pred_check_branch
        %163 = sbr.rel (%p160) target = $region12
      $region11: #{tpu_custom_call.1} parent=5 // pred_region
        %s164 = ssub.s32 %s14, 1
        // Predicated region
        $region13: #{tpu_custom_call.1} parent=11 // pred_check
          %p165 = pneg %p61
        $region14: #{tpu_custom_call.1} parent=11 // pred_check_branch
          %167 = sbr.rel (%p165) target = $region16
        $region15: #{tpu_custom_call.1} parent=11 // pred_region
          _
        $region16: #{tpu_custom_call.1} parent=11 // pred_fallthru
          _
        // Predicated region
        $region17: #{tpu_custom_call.1} parent=11 // pred_check
          %p168 = pneg %p82
        $region18: #{tpu_custom_call.1} parent=11 // pred_check_branch
          %170 = sbr.rel (%p168) target = $region20
        $region19: #{tpu_custom_call.1} parent=11 // pred_region
          _
        $region20: #{tpu_custom_call.1} parent=11 // pred_fallthru
          _
        // Predicated region
        $region21: #{tpu_custom_call.1} parent=11 // pred_check
          %p171 = pneg %p103
        $region22: #{tpu_custom_call.1} parent=11 // pred_check_branch
          %173 = sbr.rel (%p171) target = $region24
        $region23: #{tpu_custom_call.1} parent=11 // pred_region
          _
        $region24: #{tpu_custom_call.1} parent=11 // pred_fallthru
          _
        // Predicated region
        $region25: #{tpu_custom_call.1} parent=11 // pred_check
          %p174 = pneg %p124
        $region26: #{tpu_custom_call.1} parent=11 // pred_check_branch
          %176 = sbr.rel (%p174) target = $region28
        $region27: #{tpu_custom_call.1} parent=11 // pred_region
          _
        $region28: #{tpu_custom_call.1} parent=11 // pred_fallthru
          _
      $region12: #{tpu_custom_call.1} parent=5 // pred_fallthru
        _
      %p177 = scmp.lt.s32.totalorder %s14, 2
      // Predicated region
      $region29: #{tpu_custom_call.1} parent=5 // pred_check
        %p178 = pneg %p177
      $region30: #{tpu_custom_call.1} parent=5 // pred_check_branch
        %180 = sbr.rel (%p178) target = $region32
      $region31: #{tpu_custom_call.1} parent=5 // pred_region
        // Predicated region
        $region33: #{tpu_custom_call.1} parent=31 // pred_check
          %p181 = pneg %p34
        $region34: #{tpu_custom_call.1} parent=31 // pred_check_branch
          %183 = sbr.rel (%p181) target = $region36
        $region35: #{tpu_custom_call.1} parent=31 // pred_region
          %p184 = scmp.lt.s32.totalorder %s14, 1
          %s185 = scalar_select %p184, %s14, 1
          %s186 = smul.addr %s185, 8
          %s187 = scalar_lea.vmem %s0, %s186
        $region36: #{tpu_custom_call.1} parent=31 // pred_fallthru
          _
      $region32: #{tpu_custom_call.1} parent=5 // pred_fallthru
        _
      %p188 = scmp.le.s32.totalorder 1, %s14
      %p189 = scmp.lt.s32.totalorder %s14, 3
      %p190 = pnand %p188, %p189
      %p191 = pneg %p190
      // Predicated region
      $region37: #{tpu_custom_call.1} parent=5 // pred_check
        _
      $region38: #{tpu_custom_call.1} parent=5 // pred_check_branch
        %193 = sbr.rel (%p190) target = $region40
      $region39: #{tpu_custom_call.1} parent=5 // pred_region
        %s194 = ssub.s32 %s14, 1
        %p195 = scmp.lt.s32.totalorder %s19, 1
        %s196 = scalar_select %p195, %s19, 1
        %s197 = smul.addr %s196, 8
        %s198 = scalar_lea.vmem %s0, %s197
        %p199 = pneg %p40
        %p200 = pneg %p37
        %p201 = pneg %p61
        %p202 = pneg %p58
        %p203 = pneg %p82
        %p204 = pneg %p79
        %p205 = pneg %p103
        %p206 = pneg %p100
        %p207 = pneg %p124
        %p208 = pneg %p121
        %p209 = pneg %p150
        %p210 = pneg %p147
        %s211 = sand.u32 %s137, 1
        %s212 = scalar_lea.sflag [#allocation3], %s211
        %s213 = sand.u32 %s137, 1
        %s214 = smul.addr %s213, 8
        %s215 = scalar_lea.vmem [#allocation2], %s214
        %p216 = scmp.lt.s32.totalorder %s19, 1
        %s217 = scalar_select %p216, %s19, 1
        %s218 = smul.addr %s217, 8
        %s219 = scalar_lea.vmem %s0, %s218
        %v221 = vld [vmem:[%s219] sm:$0xff]
        %v222 = vpack.c.bf16 %v221, %v221
        %v223 = vld [vmem:[%s1] sm:$0xf]
        %v224 = vld [vmem:[%s1 + $0x4] sm:$0xf]
        %v225 = vld [vmem:[%s1 + $0x8] sm:$0xf]
        %v226 = vld [vmem:[%s1 + $0xc] sm:$0xf]
        %v227 = vld [vmem:[%s2] sm:$0x1]
        %v229 = vlaneseq
        %v230 = vshrl.u32 %v229, 7
        %v231 = vsub.s32 0, %v230
        %v232 = vrot.slane %v227, %v231
        %v238 = vunpack.c.l.b16 %v223
        %v239 = vunpack.c.l.b16 %v224
        %v240 = vunpack.c.l.b16 %v225
        %v241 = vunpack.c.l.b16 %v226
        %v242 = vpack.c.b16 %v239, %v238
        %v243 = vpack.c.b16 %v241, %v240
        %vm246 = vcmask 261120
        %v248 = vsel %vm246, %v222, 0
        %250 = vmatprep.subr.bf16.mxu0 0
        %251 = vmatpush1.bf16.msra.mxu0 %v242
        %252 = vmatprep.subr.bf16.mxu0 0
        %253 = vmatpush1.bf16.msra.mxu0 %v243
        %254 = vmatprep.subr.bf16.mxu0 0
        %255 = vmatpush1.bf16.msra.mxu0 0
        %256 = vmatprep.subr.bf16.mxu0 0
        %257 = vmatpush1.bf16.msra.mxu0 0
        %258 = vmatprep.subr.bf16.mxu0 0
        %259 = vmatpush1.bf16.msra.mxu0 0
        %260 = vmatprep.subr.bf16.mxu0 0
        %261 = vmatpush1.bf16.msra.mxu0 0
        %262 = vmatprep.subr.bf16.mxu0 0
        %263 = vmatpush1.bf16.msra.mxu0 0
        %264 = vmatprep.subr.bf16.mxu0 0
        %265 = vmatpush1.bf16.msra.mxu0 0
        %266 = vmatprep.subr.bf16.mxu0 0
        %267 = vmatpush1.bf16.msra.mxu0 0
        %268 = vmatprep.subr.bf16.mxu0 0
        %269 = vmatpush1.bf16.msra.mxu0 0
        %270 = vmatprep.subr.bf16.mxu0 0
        %271 = vmatpush1.bf16.msra.mxu0 0
        %272 = vmatprep.subr.bf16.mxu0 0
        %273 = vmatpush1.bf16.msra.mxu0 0
        %274 = vmatprep.subr.bf16.mxu0 0
        %275 = vmatpush1.bf16.msra.mxu0 0
        %276 = vmatprep.subr.bf16.mxu0 0
        %277 = vmatpush1.bf16.msra.mxu0 0
        %278 = vmatprep.subr.bf16.mxu0 0
        %279 = vmatpush1.bf16.msra.mxu0 0
        %280 = vmatprep.subr.bf16.mxu0 0
        %281 = vmatpush1.bf16.msra.mxu0 0
        %282 = vmatprep.mubr.bf16.mxu0 0
        %283 = vmatmul.mubr.bf16.gmra.mrb[0].mxu0 %v248
        %v284 = vpop.f32.mrb[0].mxu0
        %v285 = vadd.f32 %v232, %v284
        %v286 = vpop.f32.mrb[0].mxu0
        %v287 = vpop.f32.mrb[0].mxu0
        %v288 = vpop.f32.mrb[0].mxu0
        %289 = vdwg.mxu0
        %v290 = vmul.f32 %v285, 0.5
        %v291 = vmul.f32 %v285, 0.044715
        %v292 = vmul.f32 %v291, %v285
        %v293 = vmul.f32 %v292, %v285
        %v294 = vadd.f32 %v285, %v293
        %v295 = vmul.f32 %v294, 0.7978846
        %v296 = vtanh.pop %v295
        %v297 = vadd.f32 %v296, 1.0
        %v298 = vmul.f32 %v290, %v297
        %v299 = vpack.c.bf16 %v298, %v298
        %v300 = vld [vmem:[%s3] sm:$0xf]
        %v301 = vld [vmem:[%s3 + $0x4] sm:$0xf]
        %v302 = vld [vmem:[%s3 + $0x8] sm:$0xf]
        %v303 = vld [vmem:[%s3 + $0xc] sm:$0xf]
        %v304 = vld [vmem:[%s3 + $0x10] sm:$0xf]
        %v305 = vld [vmem:[%s3 + $0x14] sm:$0xf]
        %v306 = vld [vmem:[%s3 + $0x18] sm:$0xf]
        %v307 = vld [vmem:[%s3 + $0x1c] sm:$0xf]
        %v308 = vld [vmem:[%s3 + $0x20] sm:$0xf]
        %v309 = vld [vmem:[%s3 + $0x24] sm:$0xf]
        %v310 = vld [vmem:[%s3 + $0x28] sm:$0xf]
        %v311 = vld [vmem:[%s3 + $0x2c] sm:$0xf]
        %v312 = vld [vmem:[%s3 + $0x30] sm:$0xf]
        %v313 = vld [vmem:[%s3 + $0x34] sm:$0xf]
        %v314 = vld [vmem:[%s3 + $0x38] sm:$0xf]
        %v315 = vld [vmem:[%s3 + $0x3c] sm:$0xf]
        %v316 = vld [vmem:[%s4] sm:$0x1]
        %v318 = vlaneseq
        %v319 = vshrl.u32 %v318, 7
        %v320 = vsub.s32 0, %v319
        %v321 = vrot.slane %v316, %v320
        %v339 = vunpack.c.l.b16 %v300
        %v340 = vunpack.c.l.b16 %v301
        %v341 = vunpack.c.l.b16 %v302
        %v342 = vunpack.c.l.b16 %v303
        %v343 = vunpack.c.l.b16 %v304
        %v344 = vunpack.c.l.b16 %v305
        %v345 = vunpack.c.l.b16 %v306
        %v346 = vunpack.c.l.b16 %v307
        %v347 = vunpack.c.l.b16 %v308
        %v348 = vunpack.c.l.b16 %v309
        %v349 = vunpack.c.l.b16 %v310
        %v350 = vunpack.c.l.b16 %v311
        %v351 = vunpack.c.l.b16 %v312
        %v352 = vunpack.c.l.b16 %v313
        %v353 = vunpack.c.l.b16 %v314
        %v354 = vunpack.c.l.b16 %v315
        %v355 = vpack.c.b16 %v340, %v339
        %v356 = vpack.c.b16 %v342, %v341
        %v357 = vpack.c.b16 %v344, %v343
        %v358 = vpack.c.b16 %v346, %v345
        %v359 = vpack.c.b16 %v348, %v347
        %v360 = vpack.c.b16 %v350, %v349
        %v361 = vpack.c.b16 %v352, %v351
        %v362 = vpack.c.b16 %v354, %v353
        %371 = vmatprep.subr.bf16.mxu0 0
        %372 = vmatpush1.bf16.msra.mxu0 %v355
        %373 = vmatprep.subr.bf16.mxu0 0
        %374 = vmatpush1.bf16.msra.mxu0 %v356
        %375 = vmatprep.subr.bf16.mxu0 0
        %376 = vmatpush1.bf16.msra.mxu0 %v357
        %377 = vmatprep.subr.bf16.mxu0 0
        %378 = vmatpush1.bf16.msra.mxu0 %v358
        %379 = vmatprep.subr.bf16.mxu0 0
        %380 = vmatpush1.bf16.msra.mxu0 %v359
        %381 = vmatprep.subr.bf16.mxu0 0
        %382 = vmatpush1.bf16.msra.mxu0 %v360
        %383 = vmatprep.subr.bf16.mxu0 0
        %384 = vmatpush1.bf16.msra.mxu0 %v361
        %385 = vmatprep.subr.bf16.mxu0 0
        %386 = vmatpush1.bf16.msra.mxu0 %v362
        %387 = vmatprep.subr.bf16.mxu0 0
        %388 = vmatpush1.bf16.msra.mxu0 0
        %389 = vmatprep.subr.bf16.mxu0 0
        %390 = vmatpush1.bf16.msra.mxu0 0
        %391 = vmatprep.subr.bf16.mxu0 0
        %392 = vmatpush1.bf16.msra.mxu0 0
        %393 = vmatprep.subr.bf16.mxu0 0
        %394 = vmatpush1.bf16.msra.mxu0 0
        %395 = vmatprep.subr.bf16.mxu0 0
        %396 = vmatpush1.bf16.msra.mxu0 0
        %397 = vmatprep.subr.bf16.mxu0 0
        %398 = vmatpush1.bf16.msra.mxu0 0
        %399 = vmatprep.subr.bf16.mxu0 0
        %400 = vmatpush1.bf16.msra.mxu0 0
        %401 = vmatprep.subr.bf16.mxu0 0
        %402 = vmatpush1.bf16.msra.mxu0 0
        %403 = vmatprep.mubr.bf16.mxu0 0
        %404 = vmatmul.mubr.bf16.gmra.mrb[0].mxu0 %v299
        %v405 = vpop.f32.mrb[0].mxu0
        %v406 = vadd.f32 %v321, %v405
        %v407 = vpop.f32.mrb[0].mxu0
        %v408 = vpop.f32.mrb[0].mxu0
        %v409 = vpop.f32.mrb[0].mxu0
        %410 = vdwg.mxu0
        %411 = vst.msk [vmem:[%s215] sm:$0xff] %vm246, %v406
        %s412 = sand.u32 %s137, 1
        %s413 = scalar_lea.sflag [#allocation3], %s412
        %s414 = sand.u32 %s137, 1
        %s415 = smul.addr %s414, 8
        %s416 = scalar_lea.vmem [#allocation2], %s415
        // Predicated region
        $region41: #{tpu_custom_call.1} parent=39 // pred_check
          %p417 = pneg %p147
        $region42: #{tpu_custom_call.1} parent=39 // pred_check_branch
          %419 = sbr.rel (%p417) target = $region44
        $region43: #{tpu_custom_call.1} parent=39 // pred_region
          %s421 = ssub.s32 128, 128
          %422 = vsyncadd %s413, %s421
          %s423 = smul.addr %s19, 128
          %s424 = scalar_lea.hbm %s5, %s423
          %s426 = sshll.u32 %s416, 4
          %s427 = int_to_ptr.vmem [resolvable:$true] %s426
          %429 = dma.vmem_to_hbm [thread:$0]  %s427, 128, %s424, %s413
        $region44: #{tpu_custom_call.1} parent=39 // pred_fallthru
          _
      $region40: #{tpu_custom_call.1} parent=5 // pred_fallthru
        _
      %p430 = scmp.le.s32.totalorder 2, %s14
      // Predicated region
      $region45: #{tpu_custom_call.1} parent=5 // pred_check
        %p431 = pneg %p430
      $region46: #{tpu_custom_call.1} parent=5 // pred_check_branch
        %433 = sbr.rel (%p431) target = $region48
      $region47: #{tpu_custom_call.1} parent=5 // pred_region
        %s434 = ssub.s32 %s14, 2
        // Predicated region
        $region49: #{tpu_custom_call.1} parent=47 // pred_check
          %p435 = pneg %p153
        $region50: #{tpu_custom_call.1} parent=47 // pred_check_branch
          %437 = sbr.rel (%p435) target = $region52
        $region51: #{tpu_custom_call.1} parent=47 // pred_region
          %s438 = sand.u32 %s138, 1
          %s439 = scalar_lea.sflag [#allocation3], %s438
          %s440 = sand.u32 %s138, 1
          %s441 = smul.addr %s440, 8
          %s442 = scalar_lea.vmem [#allocation2], %s441
          %443 = dma.done %s439, 128
        $region52: #{tpu_custom_call.1} parent=47 // pred_fallthru
          _
      $region48: #{tpu_custom_call.1} parent=5 // pred_fallthru
        _
    $region6: #{tpu_custom_call.1} parent=1 // loop_footer
      %s18 = sadd.s32 1, %s14
    $region7: #{tpu_custom_call.1} parent=1 // loop_footer_branch
      %13 = sbr.rel target = $region3
    $region8: #{tpu_custom_call.1} parent=1 // loop_exit
      _
    %444 = vsyncpa [#allocation3], 1
    %s445 = scalar_lea.sflag [#allocation3], 1
    %446 = vsyncpa %s445, 1

</llo_original>
